<compile_context>
chip_gen: v6e
topology: v6e:2x2x1
jax: 0.10.0
libtpu: 0.0.40
codegen_flags: <defaults>
</compile_context>

<pallas_src>
import functools
import math

import jax
import jax.numpy as jnp
from jax.experimental import pallas as pl
from jax.experimental.pallas import tpu as pltpu

LOG_2PI = math.log(2.0 * math.pi)
_NEG_BIG = -1e30   # finite stand-in for -inf (avoids inf-inf NaN hazards)


def _gm1d_kernel(inp_ref, x_ref, w_ref, b_ref, out_ref, *, m_pad, eps):
    # inp_ref : (block_b, n_in)   natural layout, one contiguous DMA
    # x_ref   : (1, block_b)      targets, batch on lanes
    # w_ref   : (3*m_pad, n_in)   pi/mu/s groups at 8-row-aligned offsets
    # b_ref   : (3*m_pad, 1)      pi pad rows pre-filled with _NEG_BIG
    # out_ref : (1, block_b)      per-row NLL, batch on lanes

    # Single dot, contracting n_in of both operands (A @ B.T form, as used by the
    # TPU flash-attention kernels).  Result lands with batch on the lane axis.
    p = jax.lax.dot_general(
        w_ref[...], inp_ref[...],
        dimension_numbers=(((1,), (1,)), ((), ())),
        preferred_element_type=jnp.float32,
    ) + b_ref[...]                                        # (3*m_pad, bb)

    logits = p[0 * m_pad:1 * m_pad, :]                    # pad rows ~ -1e30
    mu     = p[1 * m_pad:2 * m_pad, :]
    s      = p[2 * m_pad:3 * m_pad, :]

    x = x_ref[...]                                        # (1, bb)

    if eps == 0.0:
        # sigma = exp(s):  log(sigma) == s,  1/sigma == exp(-s)
        inv_sigma = jnp.exp(-s)
        log_sigma = s
    else:
        sigma = jnp.exp(s) + eps
        # exact reciprocal (approx=True would add ~1e-3 rel. error to the NLL)
        inv_sigma = pl.reciprocal(sigma, approx=False)
        log_sigma = jnp.log(sigma)

    z = (x - mu) * inv_sigma
    log_normal = -0.5 * (z * z) - 0.5 * LOG_2PI - log_sigma       # (m_pad, bb)

    # Fused log-softmax + mixture log-sum-exp:
    #   nll = LSE_m(logits) - LSE_m(log_normal + logits)
    lw = log_normal + logits                              # pad rows stay ~ -1e30

    lmax = jnp.max(logits, axis=0, keepdims=True)
    lse_logits = jnp.log(jnp.sum(jnp.exp(logits - lmax),
                                 axis=0, keepdims=True)) + lmax

    wmax = jnp.max(lw, axis=0, keepdims=True)
    lse_lw = jnp.log(jnp.sum(jnp.exp(lw - wmax),
                             axis=0, keepdims=True)) + wmax

    out_ref[...] = lse_logits - lse_lw                    # (1, bb) NLL


def _vmem_limit_bytes():
    """Per-generation scoped-VMEM limit (~38 MiB on v7x, ~77 MiB on v5e/v6e)."""
    try:
        cap = int(getattr(pltpu.get_tpu_info(), "vmem_capacity_bytes", 64 << 20))
    except Exception:
        cap = 64 << 20     # conservative fallback, valid on every generation
    return min(int(cap * 0.6), 100 << 20)


def _pick_block_b(batch, n_in, in_itemsize, m_pad, vmem_budget):
    """Size the batch tile from the VMEM budget instead of a fixed small cap."""
    lane = 128
    n_in_vmem = ((n_in + lane - 1) // lane) * lane        # lane-padded VMEM width
    per_row = (2 * n_in_vmem * in_itemsize                # double-buffered inp tile
               + 4 * 8 * 4                                # x / out tiles (sublane-padded)
               + 13 * m_pad * 4)                          # live f32 intermediates (incl. p)
    cap = max(512, (vmem_budget // per_row) // lane * lane)
    b_lanes = pl.cdiv(batch, lane) * lane
    # keep >= 4 grid steps when the batch allows it (pipelining + v7x megacore)
    split = max(512, pl.cdiv(pl.cdiv(b_lanes, 4), lane) * lane)
    return max(lane, min(cap, split, b_lanes))


def gaussian_mixture_1d_nll(inp, x, weight, bias, *, n_mixtures, eps=0.0,
                            block_b=None, bf16_inputs=False):
    """Negative log-likelihood of a 1-D Gaussian mixture head.

    inp    : (B, n_in)
    x      : (B,) target values
    weight : (n_in, 3*n_mixtures)   (so that p = inp @ weight + bias)
    bias   : (3*n_mixtures,)
    returns: (B,) float32
    """
    B, n_in = inp.shape
    M = n_mixtures
    out_dim = 3 * M
    assert weight.shape == (n_in, out_dim)
    assert bias.shape == (out_dim,)

    m_pad = ((M + 7) // 8) * 8       # 8-row sublane alignment per parameter group

    # Keep inp in HBM as-is; optionally halve its bytes (it is ~all the traffic).
    if bf16_inputs and inp.dtype == jnp.float32:
        inp = inp.astype(jnp.bfloat16)
    compute_dtype = inp.dtype if inp.dtype == jnp.bfloat16 else jnp.float32
    inp = inp.astype(compute_dtype)
    in_itemsize = jnp.dtype(compute_dtype).itemsize

    vmem_limit = _vmem_limit_bytes()
    if block_b is None:
        block_b = _pick_block_b(B, n_in, in_itemsize, m_pad,
                                vmem_budget=int(vmem_limit * 0.7))
    assert block_b % 128 == 0
    n_blocks = pl.cdiv(B, block_b)   # ragged last block: Pallas masks the writeback

    # Pack the Linear into one (3*m_pad, n_in) weight block (groups 8-row aligned).
    w = weight.astype(compute_dtype)
    b = bias.astype(jnp.float32)
    w_packed = jnp.zeros((3 * m_pad, n_in), compute_dtype)
    b_packed = jnp.zeros((3 * m_pad,), jnp.float32)
    b_packed = b_packed.at[M:m_pad].set(_NEG_BIG)         # dead pi components
    for g in range(3):
        w_packed = w_packed.at[g * m_pad:g * m_pad + M].set(w[:, g * M:(g + 1) * M].T)
        b_packed = b_packed.at[g * m_pad:g * m_pad + M].set(b[g * M:(g + 1) * M])
    b_packed = b_packed.reshape(3 * m_pad, 1)

    x2 = x.reshape(1, B).astype(jnp.float32)              # metadata reshape only

    kernel = functools.partial(_gm1d_kernel, m_pad=m_pad, eps=float(eps))

    out = pl.pallas_call(
        kernel,
        out_shape=jax.ShapeDtypeStruct((1, B), jnp.float32),
        grid=(n_blocks,),
        in_specs=[
            pl.BlockSpec((block_b, n_in), lambda i: (i, 0)),     # inp: contiguous DMA
            pl.BlockSpec((1, block_b), lambda i: (0, i)),        # x
            pl.BlockSpec((3 * m_pad, n_in), lambda i: (0, 0)),   # packed weight
            pl.BlockSpec((3 * m_pad, 1), lambda i: (0, 0)),      # packed bias
        ],
        out_specs=pl.BlockSpec((1, block_b), lambda i: (0, i)),
        compiler_params=pltpu.CompilerParams(
            dimension_semantics=("parallel",),
            vmem_limit_bytes=vmem_limit,
        ),
    )(inp, x2, w_packed, b_packed)

    return out[0]


def _reference(inp, x, weight, bias, n_mixtures, eps=0.0):
    """Pure-JAX reference matching the PyTorch forward."""
    M = n_mixtures
    p = inp @ weight + bias
    pi = jax.nn.softmax(p[:, :M], axis=1)
    mu = p[:, M:2 * M]
    sigma = jnp.exp(p[:, 2 * M:]) + eps
    log_normal = -0.5 * ((x[:, None] - mu) / sigma) ** 2 - 0.5 * LOG_2PI - jnp.log(sigma)
    lwl = log_normal + jnp.log(pi)
    maxes = jnp.max(lwl, axis=1)
    mll = jnp.log(jnp.sum(jnp.exp(lwl - maxes[:, None]), axis=1)) + maxes
    return -mll


# TODO(synk): predict() (multinomial sampling + gather) is not implemented; only
# the forward NLL path is translated.

if __name__ == "__main__":
    # Small, forward-consistent shapes.
    B = 8            # batch
    n_in = 32        # input features (hidden)
    n_mixtures = 4   # mixture components
    eps = 0.0

    key = jax.random.PRNGKey(0)
    k_inp, k_x, k_w, k_b = jax.random.split(key, 4)

    # Deterministic parameter init (PyTorch Linear-style uniform +/- 1/sqrt(n_in)).
    bound = 1.0 / math.sqrt(n_in)
    weight = jax.random.uniform(k_w, (n_in, 3 * n_mixtures), jnp.float32, -bound, bound)
    bias = jax.random.uniform(k_b, (3 * n_mixtures,), jnp.float32, -bound, bound)

    inp = jax.random.normal(k_inp, (B, n_in), jnp.float32)
    x = jax.random.uniform(k_x, (B,), jnp.float32) * 30.0 - 15.0

    nll = gaussian_mixture_1d_nll(inp, x, weight, bias,
                                  n_mixtures=n_mixtures, eps=eps)
    nll = jax.block_until_ready(nll)

    ref = _reference(inp, x, weight, bias, n_mixtures, eps)
    assert nll.shape == (B,)
    assert jnp.allclose(nll, ref, rtol=1e-5, atol=1e-4), (nll, ref)

    print("KERNEL_OK")
</pallas_src>

<mosaic_0001>
module attributes {stable_mosaic.version = 11 : i64} {
  func.func @_gm1d_kernel(%arg0: i32, %arg1: memref<128x32xf32, #tpu.memory_space<vmem>>, %arg2: memref<1x128xf32, #tpu.memory_space<vmem>>, %arg3: memref<24x32xf32, #tpu.memory_space<vmem>>, %arg4: memref<24x1xf32, #tpu.memory_space<vmem>>, %arg5: memref<1x128xf32, #tpu.memory_space<vmem>>) attributes {dimension_semantics = [#tpu.dimension_semantics<parallel>], iteration_bounds = array<i64: 1>, scalar_prefetch = 0 : i64, scratch_operands = 0 : i64, tpu.core_type = #tpu.core_type<tc>, window_params = [{transform_indices = @transform_0, window_bounds = array<i64: 128, 32>}, {transform_indices = @transform_1, window_bounds = array<i64: 1, 128>}, {pipeline_mode = #tpu.pipeline_mode<synchronous>, transform_indices = @transform_2, window_bounds = array<i64: 24, 32>}, {pipeline_mode = #tpu.pipeline_mode<synchronous>, transform_indices = @transform_3, window_bounds = array<i64: 24, 1>}, {transform_indices = @transform_4, window_bounds = array<i64: 1, 128>}]} {
    %c0 = arith.constant 0 : index
    %c0_0 = arith.constant 0 : index
    %0 = vector.load %arg3[%c0, %c0_0] : memref<24x32xf32, #tpu.memory_space<vmem>>, vector<24x32xf32>
    %c0_1 = arith.constant 0 : index
    %c0_2 = arith.constant 0 : index
    %1 = vector.load %arg1[%c0_1, %c0_2] : memref<128x32xf32, #tpu.memory_space<vmem>>, vector<128x32xf32>
    %cst = arith.constant dense<0.000000e+00> : vector<24x128xf32>
    %2 = tpu.matmul %0, %1, %cst {dimension_numbers = #tpu.dot_dimension_numbers<[1], [1], [0], [0], [0, 0, 1, 0], [], []>} : vector<24x32xf32>, vector<128x32xf32>, vector<24x128xf32> -> vector<24x128xf32>
    %c0_3 = arith.constant 0 : index
    %c0_4 = arith.constant 0 : index
    %3 = vector.load %arg4[%c0_3, %c0_4] : memref<24x1xf32, #tpu.memory_space<vmem>>, vector<24x1xf32>
    %4 = vector.broadcast %3 : vector<24x1xf32> to vector<24x128xf32>
    %5 = arith.addf %2, %4 : vector<24x128xf32>
    %6 = vector.extract_strided_slice %5 {offsets = [0, 0], sizes = [8, 128], strides = [1, 1]} : vector<24x128xf32> to vector<8x128xf32>
    %7 = vector.extract_strided_slice %5 {offsets = [8, 0], sizes = [8, 128], strides = [1, 1]} : vector<24x128xf32> to vector<8x128xf32>
    %8 = vector.extract_strided_slice %5 {offsets = [16, 0], sizes = [8, 128], strides = [1, 1]} : vector<24x128xf32> to vector<8x128xf32>
    %c0_5 = arith.constant 0 : index
    %c0_6 = arith.constant 0 : index
    %9 = vector.load %arg2[%c0_5, %c0_6] : memref<1x128xf32, #tpu.memory_space<vmem>>, vector<1x128xf32>
    %cst_7 = arith.constant 0.000000e+00 : f32
    %10 = vector.broadcast %cst_7 : f32 to vector<8x128xf32>
    %11 = arith.subf %10, %8 : vector<8x128xf32>
    %12 = math.exp %11 : vector<8x128xf32>
    %13 = vector.broadcast %9 : vector<1x128xf32> to vector<8x128xf32>
    %14 = arith.subf %13, %7 : vector<8x128xf32>
    %15 = arith.mulf %14, %12 : vector<8x128xf32>
    %16 = arith.mulf %15, %15 : vector<8x128xf32>
    %cst_8 = arith.constant -5.000000e-01 : f32
    %17 = vector.broadcast %cst_8 : f32 to vector<8x128xf32>
    %18 = arith.mulf %17, %16 : vector<8x128xf32>
    %cst_9 = arith.constant 0.918938517 : f32
    %19 = vector.broadcast %cst_9 : f32 to vector<8x128xf32>
    %20 = arith.subf %18, %19 : vector<8x128xf32>
    %21 = arith.subf %20, %8 : vector<8x128xf32>
    %22 = arith.addf %21, %6 : vector<8x128xf32>
    %cst_10 = arith.constant dense<0xFF800000> : vector<128xf32>
    %23 = vector.multi_reduction <maximumf>, %6, %cst_10 [0] : vector<8x128xf32> to vector<128xf32>
    %24 = vector.shape_cast %23 : vector<128xf32> to vector<1x128xf32>
    %25 = vector.broadcast %24 : vector<1x128xf32> to vector<8x128xf32>
    %26 = arith.subf %6, %25 : vector<8x128xf32>
    %27 = math.exp %26 : vector<8x128xf32>
    %cst_11 = arith.constant dense<0.000000e+00> : vector<128xf32>
    %28 = vector.multi_reduction <add>, %27, %cst_11 [0] : vector<8x128xf32> to vector<128xf32>
    %29 = vector.shape_cast %28 : vector<128xf32> to vector<1x128xf32>
    %30 = math.log %29 : vector<1x128xf32>
    %31 = arith.addf %30, %24 : vector<1x128xf32>
    %cst_12 = arith.constant dense<0xFF800000> : vector<128xf32>
    %32 = vector.multi_reduction <maximumf>, %22, %cst_12 [0] : vector<8x128xf32> to vector<128xf32>
    %33 = vector.shape_cast %32 : vector<128xf32> to vector<1x128xf32>
    %34 = vector.broadcast %33 : vector<1x128xf32> to vector<8x128xf32>
    %35 = arith.subf %22, %34 : vector<8x128xf32>
    %36 = math.exp %35 : vector<8x128xf32>
    %cst_13 = arith.constant dense<0.000000e+00> : vector<128xf32>
    %37 = vector.multi_reduction <add>, %36, %cst_13 [0] : vector<8x128xf32> to vector<128xf32>
    %38 = vector.shape_cast %37 : vector<128xf32> to vector<1x128xf32>
    %39 = math.log %38 : vector<1x128xf32>
    %40 = arith.addf %39, %33 : vector<1x128xf32>
    %41 = arith.subf %31, %40 : vector<1x128xf32>
    %c0_14 = arith.constant 0 : index
    %c0_15 = arith.constant 0 : index
    %42 = vector.load %arg5[%c0_14, %c0_15] : memref<1x128xf32, #tpu.memory_space<vmem>>, vector<1x128xf32>
    tpu.vector_store %arg5[%c0_14, %c0_15], %41 {strides = array<i32>} : memref<1x128xf32, #tpu.memory_space<vmem>>, vector<1x128xf32>,
    return
  }
  func.func @transform_0(%arg0: i32) -> (i32, i32) {
    %c0_i32 = arith.constant 0 : i32
    %c0_i32_0 = arith.constant 0 : i32
    return %arg0, %c0_i32 : i32, i32
  }
  func.func @transform_1(%arg0: i32) -> (i32, i32) {
    %c0_i32 = arith.constant 0 : i32
    %c0_i32_0 = arith.constant 0 : i32
    return %c0_i32, %arg0 : i32, i32
  }
  func.func @transform_2(%arg0: i32) -> (i32, i32) {
    %c0_i32 = arith.constant 0 : i32
    %c0_i32_0 = arith.constant 0 : i32
    %c0_i32_1 = arith.constant 0 : i32
    return %c0_i32, %c0_i32_0 : i32, i32
  }
  func.func @transform_3(%arg0: i32) -> (i32, i32) {
    %c0_i32 = arith.constant 0 : i32
    %c0_i32_0 = arith.constant 0 : i32
    %c0_i32_1 = arith.constant 0 : i32
    return %c0_i32, %c0_i32_0 : i32, i32
  }
  func.func @transform_4(%arg0: i32) -> (i32, i32) {
    %c0_i32 = arith.constant 0 : i32
    %c0_i32_0 = arith.constant 0 : i32
    return %c0_i32, %arg0 : i32, i32
  }
}

</mosaic_0001>

<llo_original>
// kernel: tpu_custom_call.1
$region0: #{tpu_custom_call.1}
  #allocation0 [shape = 'u32[]', space=smem, size = 0x4, offset = 0x4, fixed_abs, tag = 'smem constant byte address 0x4 - core index']
  #allocation1 [shape = 'u32[144,128]{1,0:T(1,128)}', space=vmem, size = 0x12000, scoped, tag = 'internal scratch']
  %s0 = inlined_call_operand.hbm [shape: f32[8,32], index: 0, kind: input, shape index: {}]
  %s1 = inlined_call_operand.vmem [shape: f32[1,8], index: 1, kind: input, shape index: {}]
  %s2 = inlined_call_operand.vmem [shape: f32[24,32], index: 2, kind: input, shape index: {}]
  %s3 = inlined_call_operand.vmem [shape: f32[24,1], index: 3, kind: input, shape index: {}]
  %s4 = inlined_call_operand.hbm [shape: f32[1,8], index: 4, kind: output, shape index: {}]
  %s5 = sld [smem:[#allocation0]]
  $region30: #{tpu_custom_call.1} parent=0
    _
  %s7 = ssub.s32 1, %s5
  %s8 = scalar_select 0, %s7, %s5
  $region1: #{tpu_custom_call.1} parent=0
    #allocation2 [shape = 'u8[65536]{0}', space=vmem, size = 0x10000, scoped, tag = 'input window, operand 0, single buffered']
    #allocation3 [shape = 's32[1]{0}', space=sflag, size = 0x4, scoped, tag = 'scoped memory for tpu_custom_call.1']
    #allocation4 [shape = 's32[1]{0}', space=sflag, size = 0x4, scoped, tag = 'scoped memory for tpu_custom_call.1']
    #allocation5 [shape = 'u8[512]{0}', space=vmem, size = 0x400, scoped, tag = 'output window, operand 0, single buffered']
    %9 = vsyncpa [#allocation3], 0
    %10 = vsyncpa [#allocation4], 0
    // Predicated region
    $region2: #{tpu_custom_call.1} parent=1 // pred_check
      _
    $region3: #{tpu_custom_call.1} parent=1 // pred_check_branch
      %12 = sbr.rel (0) target = $region5
    $region4: #{tpu_custom_call.1} parent=1 // pred_region
      %s14 = ssub.s32 2048, 128
      %15 = vsyncadd [#allocation3], %s14
      %s16 = sshll.u32 [#allocation2], 4
      %s17 = int_to_ptr.vmem [resolvable:$true] %s16
      %22 = dma.hbm_to_vmem [thread:$0]  %s0, 128, %s17, [#allocation3], 128, 128, 8
    $region5: #{tpu_custom_call.1} parent=1 // pred_fallthru
      _
    // Predicated region
    $region6: #{tpu_custom_call.1} parent=1 // pred_check
      _
    $region7: #{tpu_custom_call.1} parent=1 // pred_check_branch
      %24 = sbr.rel (0) target = $region9
    $region8: #{tpu_custom_call.1} parent=1 // pred_region
      _
    $region9: #{tpu_custom_call.1} parent=1 // pred_fallthru
      _
    // Predicated region
    $region10: #{tpu_custom_call.1} parent=1 // pred_check
      _
    $region11: #{tpu_custom_call.1} parent=1 // pred_check_branch
      %26 = sbr.rel (0) target = $region13
    $region12: #{tpu_custom_call.1} parent=1 // pred_region
      _
    $region13: #{tpu_custom_call.1} parent=1 // pred_fallthru
      _
    // Predicated region
    $region14: #{tpu_custom_call.1} parent=1 // pred_check
      _
    $region15: #{tpu_custom_call.1} parent=1 // pred_check_branch
      %28 = sbr.rel (0) target = $region17
    $region16: #{tpu_custom_call.1} parent=1 // pred_region
      _
    $region17: #{tpu_custom_call.1} parent=1 // pred_fallthru
      _
    // Predicated region
    $region18: #{tpu_custom_call.1} parent=1 // pred_check
      _
    $region19: #{tpu_custom_call.1} parent=1 // pred_check_branch
      %30 = sbr.rel (0) target = $region21
    $region20: #{tpu_custom_call.1} parent=1 // pred_region
      %31 = dma.done [#allocation3], 2048
    $region21: #{tpu_custom_call.1} parent=1 // pred_fallthru
      _
    %v32 = vld [vmem:[%s2] sm:$0xff]
    %v33 = vld [vmem:[%s2 + $0x8] sm:$0xff]
    %v34 = vld [vmem:[%s2 + $0x10] sm:$0xff]
    %v35 = vld [vmem:[#allocation2] sm:$0xff]
    %v36 = vld [vmem:[#allocation2 + $0x8] sm:$0xff]
    %v37 = vld [vmem:[#allocation2 + $0x10] sm:$0xff]
    %v38 = vld [vmem:[#allocation2 + $0x18] sm:$0xff]
    %v39 = vld [vmem:[#allocation2 + $0x20] sm:$0xff]
    %v40 = vld [vmem:[#allocation2 + $0x28] sm:$0xff]
    %v41 = vld [vmem:[#allocation2 + $0x30] sm:$0xff]
    %v42 = vld [vmem:[#allocation2 + $0x38] sm:$0xff]
    %v43 = vld [vmem:[#allocation2 + $0x40] sm:$0xff]
    %v44 = vld [vmem:[#allocation2 + $0x48] sm:$0xff]
    %v45 = vld [vmem:[#allocation2 + $0x50] sm:$0xff]
    %v46 = vld [vmem:[#allocation2 + $0x58] sm:$0xff]
    %v47 = vld [vmem:[#allocation2 + $0x60] sm:$0xff]
    %v48 = vld [vmem:[#allocation2 + $0x68] sm:$0xff]
    %v49 = vld [vmem:[#allocation2 + $0x70] sm:$0xff]
    %v50 = vld [vmem:[#allocation2 + $0x78] sm:$0xff]
    %v51 = vld [vmem:[%s3] sm:$0xff]
    %v52 = vld [vmem:[%s3 + $0x8] sm:$0xff]
    %v53 = vld [vmem:[%s3 + $0x10] sm:$0xff]
    %55 = vset.pattern.permute.xlu0 0
    %56 = vperm.xlu0 %55, %v51
    %v57 = vpop.permute.xlu0 %56
    %60 = vset.pattern.permute.xlu0 0
    %61 = vperm.xlu0 %60, %v52
    %v62 = vpop.permute.xlu0 %61
    %65 = vset.pattern.permute.xlu0 0
    %66 = vperm.xlu0 %65, %v53
    %v67 = vpop.permute.xlu0 %66
    %vm69 = vcmask 261120
    %v71 = vsel %vm69, %v32, 0
    %v74 = vsel %vm69, %v33, 0
    %v77 = vsel %vm69, %v34, 0
    %v80 = vsel %vm69, %v35, 0
    %v83 = vsel %vm69, %v36, 0
    %v86 = vsel %vm69, %v37, 0
    %v89 = vsel %vm69, %v38, 0
    %v92 = vsel %vm69, %v39, 0
    %v95 = vsel %vm69, %v40, 0
    %v98 = vsel %vm69, %v41, 0
    %v101 = vsel %vm69, %v42, 0
    %v104 = vsel %vm69, %v43, 0
    %v107 = vsel %vm69, %v44, 0
    %v110 = vsel %vm69, %v45, 0
    %v113 = vsel %vm69, %v46, 0
    %v116 = vsel %vm69, %v47, 0
    %v119 = vsel %vm69, %v48, 0
    %v122 = vsel %vm69, %v49, 0
    %v125 = vsel %vm69, %v50, 0
    %127 = vmatprep.subr.mxu0 0.0
    %128 = vmatpush1.xpose.msra.mxu0 %v125
    %129 = vmatprep.subr.mxu0 0.0
    %130 = vmatpush1.xpose.msra.mxu0 %v122
    %131 = vmatprep.subr.mxu0 0.0
    %132 = vmatpush1.xpose.msra.mxu0 %v119
    %133 = vmatprep.subr.mxu0 0.0
    %134 = vmatpush1.xpose.msra.mxu0 %v116
    %135 = vmatprep.subr.mxu0 0.0
    %136 = vmatpush1.xpose.msra.mxu0 %v113
    %137 = vmatprep.subr.mxu0 0.0
    %138 = vmatpush1.xpose.msra.mxu0 %v110
    %139 = vmatprep.subr.mxu0 0.0
    %140 = vmatpush1.xpose.msra.mxu0 %v107
    %141 = vmatprep.subr.mxu0 0.0
    %142 = vmatpush1.xpose.msra.mxu0 %v104
    %143 = vmatprep.subr.mxu0 0.0
    %144 = vmatpush1.xpose.msra.mxu0 %v101
    %145 = vmatprep.subr.mxu0 0.0
    %146 = vmatpush1.xpose.msra.mxu0 %v98
    %147 = vmatprep.subr.mxu0 0.0
    %148 = vmatpush1.xpose.msra.mxu0 %v95
    %149 = vmatprep.subr.mxu0 0.0
    %150 = vmatpush1.xpose.msra.mxu0 %v92
    %151 = vmatprep.subr.mxu0 0.0
    %152 = vmatpush1.xpose.msra.mxu0 %v89
    %153 = vmatprep.subr.mxu0 0.0
    %154 = vmatpush1.xpose.msra.mxu0 %v86
    %155 = vmatprep.subr.mxu0 0.0
    %156 = vmatpush1.xpose.msra.mxu0 %v83
    %157 = vmatprep.subr.mxu0 0.0
    %158 = vmatpush1.xpose.msra.mxu0 %v80
    %159 = vmatprep.subr.mxu0 0.0
    %160 = vmatpush2.xpose.msra.mxu0 0.0
    %161 = vmatprep.subr.mxu0 0.0
    %162 = vmatpush2.xpose.msra.mxu0 0.0
    %163 = vmatprep.subr.mxu0 0.0
    %164 = vmatpush2.xpose.msra.mxu0 0.0
    %165 = vmatprep.subr.mxu0 0.0
    %166 = vmatpush2.xpose.msra.mxu0 0.0
    %167 = vmatprep.subr.mxu0 0.0
    %168 = vmatpush2.xpose.msra.mxu0 0.0
    %169 = vmatprep.subr.mxu0 0.0
    %170 = vmatpush2.xpose.msra.mxu0 0.0
    %171 = vmatprep.subr.mxu0 0.0
    %172 = vmatpush2.xpose.msra.mxu0 0.0
    %173 = vmatprep.subr.mxu0 0.0
    %174 = vmatpush2.xpose.msra.mxu0 0.0
    %175 = vmatprep.subr.mxu0 0.0
    %176 = vmatpush2.xpose.msra.mxu0 0.0
    %177 = vmatprep.subr.mxu0 0.0
    %178 = vmatpush2.xpose.msra.mxu0 0.0
    %179 = vmatprep.subr.mxu0 0.0
    %180 = vmatpush2.xpose.msra.mxu0 0.0
    %181 = vmatprep.subr.mxu0 0.0
    %182 = vmatpush2.xpose.msra.mxu0 0.0
    %183 = vmatprep.subr.mxu0 0.0
    %184 = vmatpush2.xpose.msra.mxu0 0.0
    %185 = vmatprep.subr.mxu0 0.0
    %186 = vmatpush2.xpose.msra.mxu0 0.0
    %187 = vmatprep.subr.mxu0 0.0
    %188 = vmatpush2.xpose.msra.mxu0 0.0
    %189 = vmatprep.subr.mxu0 0.0
    %190 = vmatpush2.xpose.msra.mxu0 0.0
    %191 = vmatprep.mubr.f32.mxu0 0.0
    %192 = vmatmul.mubr.f32.gmra.mxu0 %v71
    %v193 = vpop.f32.mrf.mxu0
    %v194 = vadd.f32 %v57, %v193
    %v195 = vpop.f32.mrf.mxu0
    %196 = vmatprep.mubr.f32.mxu0 0.0
    %197 = vmatmul.mubr.f32.gmra.mxu0 %v74
    %v198 = vpop.f32.mrf.mxu0
    %v199 = vadd.f32 %v62, %v198
    %v200 = vpop.f32.mrf.mxu0
    %201 = vmatprep.mubr.f32.mxu0 0.0
    %202 = vmatmul.mubr.f32.gmra.mxu0 %v77
    %v203 = vpop.f32.mrf.mxu0
    %v204 = vadd.f32 %v67, %v203
    %v205 = vpop.f32.mrf.mxu0
    %206 = vdwg.mxu0
    %v207 = vld [vmem:[%s1] sm:$0x1]
    %v208 = vsub.f32 0.0, %v204
    %v209 = vmul.f32 %v208, 1.442695
    %v210 = vpow.pop %v209
    %v212 = vlaneseq
    %v213 = vshrl.u32 %v212, 7
    %v214 = vsub.s32 0, %v213
    %v215 = vrot.slane %v207, %v214
    %v217 = vsub.f32 %v215, %v199
    %v218 = vmul.f32 %v217, %v210
    %v219 = vmul.f32 %v218, %v218
    %v220 = vmul.f32 %v219, -0.5
    %v221 = vsub.f32 %v220, 0.9189385
    %v222 = vsub.f32 %v221, %v204
    %v223 = vadd.f32 %v222, %v194
    %v224 = vrot.slane %v194, 4
    %v225 = vmax.f32 %v194, %v224
    %v226 = vrot.slane %v225, 2
    %v227 = vmax.f32 %v225, %v226
    %v228 = vrot.slane %v227, 1
    %v229 = vmax.f32 %v227, %v228
    %v230 = vsub.f32 %v194, %v229
    %v231 = vmul.f32 %v230, 1.442695
    %v232 = vpow.pop %v231
    %v233 = vrot.slane %v232, 4
    %v234 = vadd.f32 %v232, %v233
    %v235 = vrot.slane %v234, 2
    %v236 = vadd.f32 %v234, %v235
    %v237 = vrot.slane %v236, 1
    %v238 = vadd.f32 %v236, %v237
    %v239 = vlog2.pop %v238
    %v240 = vmul.f32 %v239, 0.6931472
    %v241 = vadd.f32 %v240, %v229
    %v242 = vrot.slane %v223, 4
    %v243 = vmax.f32 %v223, %v242
    %v244 = vrot.slane %v243, 2
    %v245 = vmax.f32 %v243, %v244
    %v246 = vrot.slane %v245, 1
    %v247 = vmax.f32 %v245, %v246
    %v248 = vsub.f32 %v223, %v247
    %v249 = vmul.f32 %v248, 1.442695
    %v250 = vpow.pop %v249
    %v251 = vrot.slane %v250, 4
    %v252 = vadd.f32 %v250, %v251
    %v253 = vrot.slane %v252, 2
    %v254 = vadd.f32 %v252, %v253
    %v255 = vrot.slane %v254, 1
    %v256 = vadd.f32 %v254, %v255
    %v257 = vlog2.pop %v256
    %v258 = vmul.f32 %v257, 0.6931472
    %v259 = vadd.f32 %v258, %v247
    %v260 = vsub.f32 %v241, %v259
    %261 = vst [vmem:[#allocation5] sm:$0x1] %v260
    // Predicated region
    $region22: #{tpu_custom_call.1} parent=1 // pred_check
      _
    $region23: #{tpu_custom_call.1} parent=1 // pred_check_branch
      %263 = sbr.rel (0) target = $region25
    $region24: #{tpu_custom_call.1} parent=1 // pred_region
      %s265 = ssub.s32 16, 16
      %266 = vsyncadd [#allocation4], %s265
      %s268 = sshll.u32 [#allocation5], 4
      %s269 = int_to_ptr.vmem [resolvable:$true] %s268
      %271 = dma.vmem_to_hbm [thread:$0]  %s269, 16, %s4, [#allocation4]
    $region25: #{tpu_custom_call.1} parent=1 // pred_fallthru
      _
    // Predicated region
    $region26: #{tpu_custom_call.1} parent=1 // pred_check
      _
    $region27: #{tpu_custom_call.1} parent=1 // pred_check_branch
      %273 = sbr.rel (0) target = $region29
    $region28: #{tpu_custom_call.1} parent=1 // pred_region
      %274 = dma.done [#allocation4], 16
    $region29: #{tpu_custom_call.1} parent=1 // pred_fallthru
      _
    %275 = vsyncpa [#allocation3], 1
    %276 = vsyncpa [#allocation4], 1

</llo_original>
